<compile_context>
chip_gen: v5e
topology: v5e:2x2
jax: 0.10.0
libtpu: 0.0.40
codegen_flags: <defaults>
</compile_context>

<pallas_src>
import jax
import jax.numpy as jnp
from jax.experimental import pallas as pl
from jax.experimental.pallas import tpu as pltpu


def get_transform_matrices(m=2):
    if m == 2:
        B = jnp.array([[1.0, 0.0, 0.0, 0.0],
                       [0.0, 1.0, -1.0, 1.0],
                       [-1.0, 1.0, 1.0, 0.0],
                       [0.0, 0.0, 0.0, -1.0]], dtype=jnp.float32)
        B_T = B.T
        G = jnp.array([[1.0, 0.0, 0.0],
                       [0.5, 0.5, 0.5],
                       [0.5, -0.5, 0.5],
                       [0.0, 0.0, 1.0]], dtype=jnp.float32)
        G_T = G.T
        A = jnp.array([[1.0, 0.0],
                       [1.0, 1.0],
                       [1.0, -1.0],
                       [0.0, -1.0]], dtype=jnp.float32)
        A_T = A.T
    elif m == 4:
        B_T = jnp.array([[4.0, 0.0, -5.0, 0.0, 1.0, 0.0],
                         [0.0, -4.0, -4.0, 1.0, 1.0, 0.0],
                         [0.0, 4.0, -4.0, -1.0, 1.0, 0.0],
                         [0.0, -2.0, -1.0, 2.0, 1.0, 0.0],
                         [0.0, 2.0, -1.0, -2.0, 1.0, 0.0],
                         [0.0, 4.0, 0.0, -5.0, 0.0, 1.0]], dtype=jnp.float32)
        B = B_T.T
        G = jnp.array([[1 / 4, 0.0, 0.0],
                       [-1 / 6, -1 / 6, -1 / 6],
                       [-1 / 6, 1 / 6, -1 / 6],
                       [1 / 24, 1 / 12, 1 / 6],
                       [1 / 24, -1 / 12, 1 / 6],
                       [0.0, 0.0, 1.0]], dtype=jnp.float32)
        G_T = G.T
        A_T = jnp.array([[1.0, 1.0, 1.0, 1.0, 1.0, 0.0],
                         [0.0, 1.0, -1.0, 2.0, -2.0, 0.0],
                         [0.0, 1.0, 1.0, 4.0, 4.0, 0.0],
                         [0.0, 1.0, -1.0, 8.0, -8.0, 1.0]], dtype=jnp.float32)
        A = A_T.T
    else:
        raise ValueError("m must be 2 or 4")
    return A, A_T, B, B_T, G, G_T


def _round_up(x, n):
    return ((x + n - 1) // n) * n


def _pick_tile(dim, unit, max_units):
    """Tile = unit * g, where g is the largest divisor of ceil(dim/unit) <= max_units.

    Guarantees padded_dim % tile == 0 while keeping padding overshoot < unit.
    """
    n_units = max(1, _round_up(dim, unit) // unit)
    for d in range(min(max_units, n_units), 0, -1):
        if n_units % d == 0:
            return unit * d
    return unit


def _winograd_mm_kernel(u_ref, v_ref, m_ref):
    # u_ref: (pos_blk, K_tile, C_tile)
    # v_ref: (pos_blk, C_tile, P_tile)
    # m_ref: (pos_blk, K_tile, P_tile) f32, resident across the C grid axis and
    #        used directly as the accumulator (out dtype == acc dtype).
    ct = pl.program_id(3)

    @pl.when(ct == 0)
    def _init():
        m_ref[...] = jnp.zeros_like(m_ref)

    m_ref[...] += jnp.einsum(
        "bkc,bcp->bkp", u_ref[...], v_ref[...],
        preferred_element_type=jnp.float32)


def winograd_batched_matmul(U_pos, V_pos):
    """U_pos: (a*a, K, C), V_pos: (a*a, C, P) -> (a*a, K, P) via a tiled Pallas matmul."""
    aa, K, C = U_pos.shape
    _, _, P = V_pos.shape

    # MXU-friendly tile plan: sublane dim K (mult of 8), contraction C and lane
    # dim P (mult of 128).  Tiles are divisors of the padded extents (padding
    # overshoot < 8 / 128 elements), capped so the double-buffered plan also
    # fits v7x's 64 MiB VMEM: K_tile <= 256, C_tile <= 512, P_tile <= 1024.
    K_tile = _pick_tile(K, 8, 32)
    C_tile = _pick_tile(C, 128, 4)
    P_tile = _pick_tile(P, 128, 8)
    K_pad = _round_up(K, K_tile)
    C_pad = _round_up(C, C_tile)
    P_pad = _round_up(P, P_tile)

    # Amortize grid-step overhead: pack several Winograd positions per step
    # while keeping one step's block set within a VMEM budget.
    per_pos_bytes = 4 * (K_tile * C_tile + C_tile * P_tile + K_tile * P_tile)
    budget = 6 * 1024 * 1024
    pos_blk = 1
    for d in range(aa, 0, -1):
        if aa % d == 0 and d * per_pos_bytes <= budget:
            pos_blk = d
            break

    if (K_pad, C_pad) != (K, C):
        U_pos = jnp.pad(U_pos, ((0, 0), (0, K_pad - K), (0, C_pad - C)))
    if (C_pad, P_pad) != (C, P):
        V_pos = jnp.pad(V_pos, ((0, 0), (0, C_pad - C), (0, P_pad - P)))

    grid = (aa // pos_blk, K_pad // K_tile, P_pad // P_tile, C_pad // C_tile)

    blk_bytes = pos_blk * per_pos_bytes
    vmem_limit = int(min(44 * 2 ** 20, max(16 * 2 ** 20, 2 * blk_bytes + (4 << 20))))

    cost = pl.CostEstimate(
        flops=int(2 * aa * K_pad * C_pad * P_pad),
        transcendentals=0,
        bytes_accessed=int(4 * aa * (K_pad * C_pad + C_pad * P_pad + K_pad * P_pad)),
    )

    out = pl.pallas_call(
        _winograd_mm_kernel,
        out_shape=jax.ShapeDtypeStruct((aa, K_pad, P_pad), jnp.float32),
        grid_spec=pltpu.PrefetchScalarGridSpec(
            num_scalar_prefetch=0,
            grid=grid,
            in_specs=[
                pl.BlockSpec((pos_blk, K_tile, C_tile),
                             lambda p, kt, pt, ct: (p, kt, ct)),
                pl.BlockSpec((pos_blk, C_tile, P_tile),
                             lambda p, kt, pt, ct: (p, ct, pt)),
            ],
            out_specs=pl.BlockSpec((pos_blk, K_tile, P_tile),
                                   lambda p, kt, pt, ct: (p, kt, pt)),
        ),
        compiler_params=pltpu.CompilerParams(
            dimension_semantics=("parallel", "parallel", "parallel", "arbitrary"),
            vmem_limit_bytes=vmem_limit),
        cost_estimate=cost,
    )(U_pos, V_pos)

    return out[:, :K, :P]


def winograd_forward(x, weight, m):
    """Winograd conv F(m x m, r x r), matching the PyTorch reference semantics."""
    N, C, H, W = x.shape
    K, _, r, _ = weight.shape
    assert H == W
    a = m + r - 1
    if not (H >= 4 and H % 2 == 0):
        raise Exception("Only input for perfect tiling is supported.")
    out_size = H - r + 1
    if out_size % m != 0:
        # Otherwise (e.g. m=4, H=16) tile indices would run past the image and
        # be silently clamped, producing wrong edge tiles.
        raise Exception("Only input for perfect tiling is supported.")
    T = out_size // m
    P = N * T * T

    A, A_T, B, B_T, G, G_T = get_transform_matrices(m)

    x = x.astype(jnp.float32)
    weight = weight.astype(jnp.float32)

    # ---- filter transform U = G w G^T, produced directly in (a*a, K, C) layout
    U_pos = jnp.einsum("ij,kcjl,lm->imkc", G, weight, G_T).reshape(a * a, K, C)

    # ---- input tile extraction (stride m, window a) + transform V = B^T d B,
    #      produced directly in (a*a, C, P) layout (P is the lane dim downstream).
    h_idx = jnp.arange(T)[:, None] * m + jnp.arange(a)[None, :]  # (T, a)
    tiles = x[:, :, h_idx, :]            # (N, C, Th, ah, W)
    tiles = tiles[:, :, :, :, h_idx]     # (N, C, Th, ah, Tw, aw)
    tiles = tiles.transpose(1, 0, 2, 4, 3, 5).reshape(C, P, a, a)
    V_pos = jnp.einsum("ij,cpjl,lk->ikcp", B_T, tiles, B).reshape(a * a, C, P)

    # ---- hot path: tiled, accumulated (K,C)x(C,P) matmuls on the MXU
    M_pos = winograd_batched_matmul(U_pos, V_pos)        # (a*a, K, P)
    M = M_pos.reshape(a, a, K, P)

    # ---- output transform Y_tile = A^T M A, then scatter tiles into the image
    Yt = jnp.einsum("ij,jlkp,lm->kpim", A_T, M, A)       # (K, P, m, m)
    Yt = Yt.reshape(K, N, T, T, m, m).transpose(1, 0, 2, 4, 3, 5)
    Y = Yt.reshape(N, K, T * m, T * m)[:, :, :out_size, :out_size]
    return Y


if __name__ == "__main__":
    key = jax.random.PRNGKey(0)
    kx, kw = jax.random.split(key)

    N, C, H, W = 2, 4, 16, 16
    K, r = 4, 3
    m = 2  # output tile size (F(2x2, 3x3))

    x = jax.random.normal(kx, (N, C, H, W), dtype=jnp.float32)
    w = jax.random.normal(kw, (K, C, r, r), dtype=jnp.float32)

    fwd = jax.jit(winograd_forward, static_argnums=2)
    y = fwd(x, w, m)
    y = jax.block_until_ready(y)

    # sanity check against a direct valid (cross-correlation) convolution
    ref = jax.lax.conv_general_dilated(
        x, w, window_strides=(1, 1), padding="VALID",
        dimension_numbers=("NCHW", "OIHW", "NCHW"))
    assert y.shape == ref.shape == (N, K, H - r + 1, W - r + 1)
    assert bool(jnp.allclose(y, ref, atol=1e-3, rtol=1e-4))

    print("KERNEL_OK")
</pallas_src>

<mosaic_0001>
module attributes {stable_mosaic.version = 11 : i64} {
  func.func @_winograd_mm_kernel(%arg0: i32, %arg1: i32, %arg2: i32, %arg3: i32, %arg4: memref<16x8x128xf32, #tpu.memory_space<vmem>>, %arg5: memref<16x128x128xf32, #tpu.memory_space<vmem>>, %arg6: memref<16x8x128xf32, #tpu.memory_space<vmem>>) attributes {dimension_semantics = [#tpu.dimension_semantics<parallel>, #tpu.dimension_semantics<parallel>, #tpu.dimension_semantics<parallel>, #tpu.dimension_semantics<arbitrary>], iteration_bounds = array<i64: 1, 1, 1, 1>, scalar_prefetch = 0 : i64, scratch_operands = 0 : i64, tpu.core_type = #tpu.core_type<tc>, window_params = [{transform_indices = @transform_0, window_bounds = array<i64: 16, 8, 128>}, {transform_indices = @transform_1, window_bounds = array<i64: 16, 128, 128>}, {transform_indices = @transform_2, window_bounds = array<i64: 16, 8, 128>}]} {
    %c0_i32 = arith.constant 0 : i32
    %0 = arith.cmpi eq, %arg3, %c0_i32 : i32
    %1 = arith.extui %0 : i1 to i32
    %c0_i32_0 = arith.constant 0 : i32
    %2 = arith.cmpi ne, %1, %c0_i32_0 : i32
    scf.if %2 {
      %cst_12 = arith.constant 0.000000e+00 : f32
      %9 = vector.broadcast %cst_12 : f32 to vector<16x8x128xf32>
      %c0_13 = arith.constant 0 : index
      %c0_14 = arith.constant 0 : index
      %c0_15 = arith.constant 0 : index
      %10 = vector.load %arg6[%c0_13, %c0_14, %c0_15] : memref<16x8x128xf32, #tpu.memory_space<vmem>>, vector<16x8x128xf32>
      tpu.vector_store %arg6[%c0_13, %c0_14, %c0_15], %9 {strides = array<i32>} : memref<16x8x128xf32, #tpu.memory_space<vmem>>, vector<16x8x128xf32>,
    } else {
    }
    %c0 = arith.constant 0 : index
    %c0_1 = arith.constant 0 : index
    %c0_2 = arith.constant 0 : index
    %3 = vector.load %arg6[%c0, %c0_1, %c0_2] : memref<16x8x128xf32, #tpu.memory_space<vmem>>, vector<16x8x128xf32>
    %c0_3 = arith.constant 0 : index
    %c0_4 = arith.constant 0 : index
    %c0_5 = arith.constant 0 : index
    %4 = vector.load %arg4[%c0_3, %c0_4, %c0_5] : memref<16x8x128xf32, #tpu.memory_space<vmem>>, vector<16x8x128xf32>
    %c0_6 = arith.constant 0 : index
    %c0_7 = arith.constant 0 : index
    %c0_8 = arith.constant 0 : index
    %5 = vector.load %arg5[%c0_6, %c0_7, %c0_8] : memref<16x128x128xf32, #tpu.memory_space<vmem>>, vector<16x128x128xf32>
    "tpu.trace_start"() <{level = 10 : i32, message = "bkc,bcp->bkp"}> : () -> ()
    %cst = arith.constant dense<0.000000e+00> : vector<16x8x128xf32>
    %6 = tpu.matmul %4, %5, %cst {dimension_numbers = #tpu.dot_dimension_numbers<[2], [1], [1], [2], [0, 0, 0, 1, 1, 2], [0], [0]>} : vector<16x8x128xf32>, vector<16x128x128xf32>, vector<16x8x128xf32> -> vector<16x8x128xf32>
    "tpu.trace_stop"() : () -> ()
    %7 = arith.addf %3, %6 : vector<16x8x128xf32>
    %c0_9 = arith.constant 0 : index
    %c0_10 = arith.constant 0 : index
    %c0_11 = arith.constant 0 : index
    %8 = vector.load %arg6[%c0_9, %c0_10, %c0_11] : memref<16x8x128xf32, #tpu.memory_space<vmem>>, vector<16x8x128xf32>
    tpu.vector_store %arg6[%c0_9, %c0_10, %c0_11], %7 {strides = array<i32>} : memref<16x8x128xf32, #tpu.memory_space<vmem>>, vector<16x8x128xf32>,
    return
  }
  func.func @transform_0(%arg0: i32, %arg1: i32, %arg2: i32, %arg3: i32) -> (i32, i32, i32) {
    %c0_i32 = arith.constant 0 : i32
    return %arg0, %arg1, %arg3 : i32, i32, i32
  }
  func.func @transform_1(%arg0: i32, %arg1: i32, %arg2: i32, %arg3: i32) -> (i32, i32, i32) {
    %c0_i32 = arith.constant 0 : i32
    return %arg0, %arg3, %arg2 : i32, i32, i32
  }
  func.func @transform_2(%arg0: i32, %arg1: i32, %arg2: i32, %arg3: i32) -> (i32, i32, i32) {
    %c0_i32 = arith.constant 0 : i32
    return %arg0, %arg1, %arg2 : i32, i32, i32
  }
}

</mosaic_0001>

<llo_original>
// kernel: winograd_forward.1
$region0: #{winograd_forward.1}
  #allocation0 [shape = 'u32[]', space=smem, size = 0x4, offset = 0x4, fixed_abs, tag = 'smem constant byte address 0x4 - core index']
  #allocation1 [shape = 'u32[72,128]{1,0:T(1,128)}', space=vmem, size = 0x9000, scoped, tag = 'internal scratch']
  %s0 = inlined_call_operand.vmem [shape: f32[16,8,128], index: 0, kind: input, shape index: {}]
  %s1 = inlined_call_operand.vmem [shape: f32[16,128,128], index: 1, kind: input, shape index: {}]
  %s2 = inlined_call_operand.vmem [shape: f32[16,8,128], index: 2, kind: output, shape index: {}]
  %s3 = sld [smem:[#allocation0]]
  $region22: #{winograd_forward.1} parent=0
    _
  %s5 = ssub.s32 1, %s3
  %s6 = scalar_select 0, %s5, %s3
  // Predicated region
  $region2: #{winograd_forward.1} parent=0 // pred_check
    _
  $region3: #{winograd_forward.1} parent=0 // pred_check_branch
    %8 = sbr.rel (0) target = $region5
  $region4: #{winograd_forward.1} parent=0 // pred_region
    _
  $region5: #{winograd_forward.1} parent=0 // pred_fallthru
    _
  // Predicated region
  $region6: #{winograd_forward.1} parent=0 // pred_check
    _
  $region7: #{winograd_forward.1} parent=0 // pred_check_branch
    %10 = sbr.rel (0) target = $region9
  $region8: #{winograd_forward.1} parent=0 // pred_region
    _
  $region9: #{winograd_forward.1} parent=0 // pred_fallthru
    _
  %p11 = scmp.eq.s32.totalorder 0, 0
  // Predicated region
  $region10: #{winograd_forward.1} parent=0 // pred_check
    %p12 = pneg %p11
  $region11: #{winograd_forward.1} parent=0 // pred_check_branch
    %14 = sbr.rel (%p12) target = $region13
  $region12: #{winograd_forward.1} parent=0 // pred_region
    %15 = vst [vmem:[%s2] sm:$0xff] 0.0
    %16 = vst [vmem:[%s2 + $0x8] sm:$0xff] 0.0
    %17 = vst [vmem:[%s2 + $0x10] sm:$0xff] 0.0
    %18 = vst [vmem:[%s2 + $0x18] sm:$0xff] 0.0
    %19 = vst [vmem:[%s2 + $0x20] sm:$0xff] 0.0
    %20 = vst [vmem:[%s2 + $0x28] sm:$0xff] 0.0
    %21 = vst [vmem:[%s2 + $0x30] sm:$0xff] 0.0
    %22 = vst [vmem:[%s2 + $0x38] sm:$0xff] 0.0
    %23 = vst [vmem:[%s2 + $0x40] sm:$0xff] 0.0
    %24 = vst [vmem:[%s2 + $0x48] sm:$0xff] 0.0
    %25 = vst [vmem:[%s2 + $0x50] sm:$0xff] 0.0
    %26 = vst [vmem:[%s2 + $0x58] sm:$0xff] 0.0
    %27 = vst [vmem:[%s2 + $0x60] sm:$0xff] 0.0
    %28 = vst [vmem:[%s2 + $0x68] sm:$0xff] 0.0
    %29 = vst [vmem:[%s2 + $0x70] sm:$0xff] 0.0
    %30 = vst [vmem:[%s2 + $0x78] sm:$0xff] 0.0
  $region13: #{winograd_forward.1} parent=0 // pred_fallthru
    _
  %v31 = vld [vmem:[%s2] sm:$0xff]
  %v32 = vld [vmem:[%s2 + $0x8] sm:$0xff]
  %v33 = vld [vmem:[%s2 + $0x10] sm:$0xff]
  %v34 = vld [vmem:[%s2 + $0x18] sm:$0xff]
  %v35 = vld [vmem:[%s2 + $0x20] sm:$0xff]
  %v36 = vld [vmem:[%s2 + $0x28] sm:$0xff]
  %v37 = vld [vmem:[%s2 + $0x30] sm:$0xff]
  %v38 = vld [vmem:[%s2 + $0x38] sm:$0xff]
  %v39 = vld [vmem:[%s2 + $0x40] sm:$0xff]
  %v40 = vld [vmem:[%s2 + $0x48] sm:$0xff]
  %v41 = vld [vmem:[%s2 + $0x50] sm:$0xff]
  %v42 = vld [vmem:[%s2 + $0x58] sm:$0xff]
  %v43 = vld [vmem:[%s2 + $0x60] sm:$0xff]
  %v44 = vld [vmem:[%s2 + $0x68] sm:$0xff]
  %v45 = vld [vmem:[%s2 + $0x70] sm:$0xff]
  %v46 = vld [vmem:[%s2 + $0x78] sm:$0xff]
  %v47 = vld [vmem:[%s0] sm:$0xff]
  %v48 = vld [vmem:[%s0 + $0x8] sm:$0xff]
  %v49 = vld [vmem:[%s0 + $0x10] sm:$0xff]
  %v50 = vld [vmem:[%s0 + $0x18] sm:$0xff]
  %v51 = vld [vmem:[%s0 + $0x20] sm:$0xff]
  %v52 = vld [vmem:[%s0 + $0x28] sm:$0xff]
  %v53 = vld [vmem:[%s0 + $0x30] sm:$0xff]
  %v54 = vld [vmem:[%s0 + $0x38] sm:$0xff]
  %v55 = vld [vmem:[%s0 + $0x40] sm:$0xff]
  %v56 = vld [vmem:[%s0 + $0x48] sm:$0xff]
  %v57 = vld [vmem:[%s0 + $0x50] sm:$0xff]
  %v58 = vld [vmem:[%s0 + $0x58] sm:$0xff]
  %v59 = vld [vmem:[%s0 + $0x60] sm:$0xff]
  %v60 = vld [vmem:[%s0 + $0x68] sm:$0xff]
  %v61 = vld [vmem:[%s0 + $0x70] sm:$0xff]
  %v62 = vld [vmem:[%s0 + $0x78] sm:$0xff]
  %v63 = vld [vmem:[%s1] sm:$0xff]
  %v64 = vld [vmem:[%s1 + $0x8] sm:$0xff]
  %v65 = vld [vmem:[%s1 + $0x10] sm:$0xff]
  %v66 = vld [vmem:[%s1 + $0x18] sm:$0xff]
  %v67 = vld [vmem:[%s1 + $0x20] sm:$0xff]
  %v68 = vld [vmem:[%s1 + $0x28] sm:$0xff]
  %v69 = vld [vmem:[%s1 + $0x30] sm:$0xff]
  %v70 = vld [vmem:[%s1 + $0x38] sm:$0xff]
  %v71 = vld [vmem:[%s1 + $0x40] sm:$0xff]
  %v72 = vld [vmem:[%s1 + $0x48] sm:$0xff]
  %v73 = vld [vmem:[%s1 + $0x50] sm:$0xff]
  %v74 = vld [vmem:[%s1 + $0x58] sm:$0xff]
  %v75 = vld [vmem:[%s1 + $0x60] sm:$0xff]
  %v76 = vld [vmem:[%s1 + $0x68] sm:$0xff]
  %v77 = vld [vmem:[%s1 + $0x70] sm:$0xff]
  %v78 = vld [vmem:[%s1 + $0x78] sm:$0xff]
  %v79 = vld [vmem:[%s1 + $0x80] sm:$0xff]
  %v80 = vld [vmem:[%s1 + $0x88] sm:$0xff]
  %v81 = vld [vmem:[%s1 + $0x90] sm:$0xff]
  %v82 = vld [vmem:[%s1 + $0x98] sm:$0xff]
  %v83 = vld [vmem:[%s1 + $0xa0] sm:$0xff]
  %v84 = vld [vmem:[%s1 + $0xa8] sm:$0xff]
  %v85 = vld [vmem:[%s1 + $0xb0] sm:$0xff]
  %v86 = vld [vmem:[%s1 + $0xb8] sm:$0xff]
  %v87 = vld [vmem:[%s1 + $0xc0] sm:$0xff]
  %v88 = vld [vmem:[%s1 + $0xc8] sm:$0xff]
  %v89 = vld [vmem:[%s1 + $0xd0] sm:$0xff]
  %v90 = vld [vmem:[%s1 + $0xd8] sm:$0xff]
  %v91 = vld [vmem:[%s1 + $0xe0] sm:$0xff]
  %v92 = vld [vmem:[%s1 + $0xe8] sm:$0xff]
  %v93 = vld [vmem:[%s1 + $0xf0] sm:$0xff]
  %v94 = vld [vmem:[%s1 + $0xf8] sm:$0xff]
  %v95 = vld [vmem:[%s1 + $0x100] sm:$0xff]
  %v96 = vld [vmem:[%s1 + $0x108] sm:$0xff]
  %v97 = vld [vmem:[%s1 + $0x110] sm:$0xff]
  %v98 = vld [vmem:[%s1 + $0x118] sm:$0xff]
  %v99 = vld [vmem:[%s1 + $0x120] sm:$0xff]
  %v100 = vld [vmem:[%s1 + $0x128] sm:$0xff]
  %v101 = vld [vmem:[%s1 + $0x130] sm:$0xff]
  %v102 = vld [vmem:[%s1 + $0x138] sm:$0xff]
  %v103 = vld [vmem:[%s1 + $0x140] sm:$0xff]
  %v104 = vld [vmem:[%s1 + $0x148] sm:$0xff]
  %v105 = vld [vmem:[%s1 + $0x150] sm:$0xff]
  %v106 = vld [vmem:[%s1 + $0x158] sm:$0xff]
  %v107 = vld [vmem:[%s1 + $0x160] sm:$0xff]
  %v108 = vld [vmem:[%s1 + $0x168] sm:$0xff]
  %v109 = vld [vmem:[%s1 + $0x170] sm:$0xff]
  %v110 = vld [vmem:[%s1 + $0x178] sm:$0xff]
  %v111 = vld [vmem:[%s1 + $0x180] sm:$0xff]
  %v112 = vld [vmem:[%s1 + $0x188] sm:$0xff]
  %v113 = vld [vmem:[%s1 + $0x190] sm:$0xff]
  %v114 = vld [vmem:[%s1 + $0x198] sm:$0xff]
  %v115 = vld [vmem:[%s1 + $0x1a0] sm:$0xff]
  %v116 = vld [vmem:[%s1 + $0x1a8] sm:$0xff]
  %v117 = vld [vmem:[%s1 + $0x1b0] sm:$0xff]
  %v118 = vld [vmem:[%s1 + $0x1b8] sm:$0xff]
  %v119 = vld [vmem:[%s1 + $0x1c0] sm:$0xff]
  %v120 = vld [vmem:[%s1 + $0x1c8] sm:$0xff]
  %v121 = vld [vmem:[%s1 + $0x1d0] sm:$0xff]
  %v122 = vld [vmem:[%s1 + $0x1d8] sm:$0xff]
  %v123 = vld [vmem:[%s1 + $0x1e0] sm:$0xff]
  %v124 = vld [vmem:[%s1 + $0x1e8] sm:$0xff]
  %v125 = vld [vmem:[%s1 + $0x1f0] sm:$0xff]
  %v126 = vld [vmem:[%s1 + $0x1f8] sm:$0xff]
  %v127 = vld [vmem:[%s1 + $0x200] sm:$0xff]
  %v128 = vld [vmem:[%s1 + $0x208] sm:$0xff]
  %v129 = vld [vmem:[%s1 + $0x210] sm:$0xff]
  %v130 = vld [vmem:[%s1 + $0x218] sm:$0xff]
  %v131 = vld [vmem:[%s1 + $0x220] sm:$0xff]
  %v132 = vld [vmem:[%s1 + $0x228] sm:$0xff]
  %v133 = vld [vmem:[%s1 + $0x230] sm:$0xff]
  %v134 = vld [vmem:[%s1 + $0x238] sm:$0xff]
  %v135 = vld [vmem:[%s1 + $0x240] sm:$0xff]
  %v136 = vld [vmem:[%s1 + $0x248] sm:$0xff]
  %v137 = vld [vmem:[%s1 + $0x250] sm:$0xff]
  %v138 = vld [vmem:[%s1 + $0x258] sm:$0xff]
  %v139 = vld [vmem:[%s1 + $0x260] sm:$0xff]
  %v140 = vld [vmem:[%s1 + $0x268] sm:$0xff]
  %v141 = vld [vmem:[%s1 + $0x270] sm:$0xff]
  %v142 = vld [vmem:[%s1 + $0x278] sm:$0xff]
  %v143 = vld [vmem:[%s1 + $0x280] sm:$0xff]
  %v144 = vld [vmem:[%s1 + $0x288] sm:$0xff]
  %v145 = vld [vmem:[%s1 + $0x290] sm:$0xff]
  %v146 = vld [vmem:[%s1 + $0x298] sm:$0xff]
  %v147 = vld [vmem:[%s1 + $0x2a0] sm:$0xff]
  %v148 = vld [vmem:[%s1 + $0x2a8] sm:$0xff]
  %v149 = vld [vmem:[%s1 + $0x2b0] sm:$0xff]
  %v150 = vld [vmem:[%s1 + $0x2b8] sm:$0xff]
  %v151 = vld [vmem:[%s1 + $0x2c0] sm:$0xff]
  %v152 = vld [vmem:[%s1 + $0x2c8] sm:$0xff]
  %v153 = vld [vmem:[%s1 + $0x2d0] sm:$0xff]
  %v154 = vld [vmem:[%s1 + $0x2d8] sm:$0xff]
  %v155 = vld [vmem:[%s1 + $0x2e0] sm:$0xff]
  %v156 = vld [vmem:[%s1 + $0x2e8] sm:$0xff]
  %v157 = vld [vmem:[%s1 + $0x2f0] sm:$0xff]
  %v158 = vld [vmem:[%s1 + $0x2f8] sm:$0xff]
  %v159 = vld [vmem:[%s1 + $0x300] sm:$0xff]
  %v160 = vld [vmem:[%s1 + $0x308] sm:$0xff]
  %v161 = vld [vmem:[%s1 + $0x310] sm:$0xff]
  %v162 = vld [vmem:[%s1 + $0x318] sm:$0xff]
  %v163 = vld [vmem:[%s1 + $0x320] sm:$0xff]
  %v164 = vld [vmem:[%s1 + $0x328] sm:$0xff]
  %v165 = vld [vmem:[%s1 + $0x330] sm:$0xff]
  %v166 = vld [vmem:[%s1 + $0x338] sm:$0xff]
  %v167 = vld [vmem:[%s1 + $0x340] sm:$0xff]
  %v168 = vld [vmem:[%s1 + $0x348] sm:$0xff]
  %v169 = vld [vmem:[%s1 + $0x350] sm:$0xff]
  %v170 = vld [vmem:[%s1 + $0x358] sm:$0xff]
  %v171 = vld [vmem:[%s1 + $0x360] sm:$0xff]
  %v172 = vld [vmem:[%s1 + $0x368] sm:$0xff]
  %v173 = vld [vmem:[%s1 + $0x370] sm:$0xff]
  %v174 = vld [vmem:[%s1 + $0x378] sm:$0xff]
  %v175 = vld [vmem:[%s1 + $0x380] sm:$0xff]
  %v176 = vld [vmem:[%s1 + $0x388] sm:$0xff]
  %v177 = vld [vmem:[%s1 + $0x390] sm:$0xff]
  %v178 = vld [vmem:[%s1 + $0x398] sm:$0xff]
  %v179 = vld [vmem:[%s1 + $0x3a0] sm:$0xff]
  %v180 = vld [vmem:[%s1 + $0x3a8] sm:$0xff]
  %v181 = vld [vmem:[%s1 + $0x3b0] sm:$0xff]
  %v182 = vld [vmem:[%s1 + $0x3b8] sm:$0xff]
  %v183 = vld [vmem:[%s1 + $0x3c0] sm:$0xff]
  %v184 = vld [vmem:[%s1 + $0x3c8] sm:$0xff]
  %v185 = vld [vmem:[%s1 + $0x3d0] sm:$0xff]
  %v186 = vld [vmem:[%s1 + $0x3d8] sm:$0xff]
  %v187 = vld [vmem:[%s1 + $0x3e0] sm:$0xff]
  %v188 = vld [vmem:[%s1 + $0x3e8] sm:$0xff]
  %v189 = vld [vmem:[%s1 + $0x3f0] sm:$0xff]
  %v190 = vld [vmem:[%s1 + $0x3f8] sm:$0xff]
  %v191 = vld [vmem:[%s1 + $0x400] sm:$0xff]
  %v192 = vld [vmem:[%s1 + $0x408] sm:$0xff]
  %v193 = vld [vmem:[%s1 + $0x410] sm:$0xff]
  %v194 = vld [vmem:[%s1 + $0x418] sm:$0xff]
  %v195 = vld [vmem:[%s1 + $0x420] sm:$0xff]
  %v196 = vld [vmem:[%s1 + $0x428] sm:$0xff]
  %v197 = vld [vmem:[%s1 + $0x430] sm:$0xff]
  %v198 = vld [vmem:[%s1 + $0x438] sm:$0xff]
  %v199 = vld [vmem:[%s1 + $0x440] sm:$0xff]
  %v200 = vld [vmem:[%s1 + $0x448] sm:$0xff]
  %v201 = vld [vmem:[%s1 + $0x450] sm:$0xff]
  %v202 = vld [vmem:[%s1 + $0x458] sm:$0xff]
  %v203 = vld [vmem:[%s1 + $0x460] sm:$0xff]
  %v204 = vld [vmem:[%s1 + $0x468] sm:$0xff]
  %v205 = vld [vmem:[%s1 + $0x470] sm:$0xff]
  %v206 = vld [vmem:[%s1 + $0x478] sm:$0xff]
  %v207 = vld [vmem:[%s1 + $0x480] sm:$0xff]
  %v208 = vld [vmem:[%s1 + $0x488] sm:$0xff]
  %v209 = vld [vmem:[%s1 + $0x490] sm:$0xff]
  %v210 = vld [vmem:[%s1 + $0x498] sm:$0xff]
  %v211 = vld [vmem:[%s1 + $0x4a0] sm:$0xff]
  %v212 = vld [vmem:[%s1 + $0x4a8] sm:$0xff]
  %v213 = vld [vmem:[%s1 + $0x4b0] sm:$0xff]
  %v214 = vld [vmem:[%s1 + $0x4b8] sm:$0xff]
  %v215 = vld [vmem:[%s1 + $0x4c0] sm:$0xff]
  %v216 = vld [vmem:[%s1 + $0x4c8] sm:$0xff]
  %v217 = vld [vmem:[%s1 + $0x4d0] sm:$0xff]
  %v218 = vld [vmem:[%s1 + $0x4d8] sm:$0xff]
  %v219 = vld [vmem:[%s1 + $0x4e0] sm:$0xff]
  %v220 = vld [vmem:[%s1 + $0x4e8] sm:$0xff]
  %v221 = vld [vmem:[%s1 + $0x4f0] sm:$0xff]
  %v222 = vld [vmem:[%s1 + $0x4f8] sm:$0xff]
  %v223 = vld [vmem:[%s1 + $0x500] sm:$0xff]
  %v224 = vld [vmem:[%s1 + $0x508] sm:$0xff]
  %v225 = vld [vmem:[%s1 + $0x510] sm:$0xff]
  %v226 = vld [vmem:[%s1 + $0x518] sm:$0xff]
  %v227 = vld [vmem:[%s1 + $0x520] sm:$0xff]
  %v228 = vld [vmem:[%s1 + $0x528] sm:$0xff]
  %v229 = vld [vmem:[%s1 + $0x530] sm:$0xff]
  %v230 = vld [vmem:[%s1 + $0x538] sm:$0xff]
  %v231 = vld [vmem:[%s1 + $0x540] sm:$0xff]
  %v232 = vld [vmem:[%s1 + $0x548] sm:$0xff]
  %v233 = vld [vmem:[%s1 + $0x550] sm:$0xff]
  %v234 = vld [vmem:[%s1 + $0x558] sm:$0xff]
  %v235 = vld [vmem:[%s1 + $0x560] sm:$0xff]
  %v236 = vld [vmem:[%s1 + $0x568] sm:$0xff]
  %v237 = vld [vmem:[%s1 + $0x570] sm:$0xff]
  %v238 = vld [vmem:[%s1 + $0x578] sm:$0xff]
  %v239 = vld [vmem:[%s1 + $0x580] sm:$0xff]
  %v240 = vld [vmem:[%s1 + $0x588] sm:$0xff]
  %v241 = vld [vmem:[%s1 + $0x590] sm:$0xff]
  %v242 = vld [vmem:[%s1 + $0x598] sm:$0xff]
  %v243 = vld [vmem:[%s1 + $0x5a0] sm:$0xff]
  %v244 = vld [vmem:[%s1 + $0x5a8] sm:$0xff]
  %v245 = vld [vmem:[%s1 + $0x5b0] sm:$0xff]
  %v246 = vld [vmem:[%s1 + $0x5b8] sm:$0xff]
  %v247 = vld [vmem:[%s1 + $0x5c0] sm:$0xff]
  %v248 = vld [vmem:[%s1 + $0x5c8] sm:$0xff]
  %v249 = vld [vmem:[%s1 + $0x5d0] sm:$0xff]
  %v250 = vld [vmem:[%s1 + $0x5d8] sm:$0xff]
  %v251 = vld [vmem:[%s1 + $0x5e0] sm:$0xff]
  %v252 = vld [vmem:[%s1 + $0x5e8] sm:$0xff]
  %v253 = vld [vmem:[%s1 + $0x5f0] sm:$0xff]
  %v254 = vld [vmem:[%s1 + $0x5f8] sm:$0xff]
  %v255 = vld [vmem:[%s1 + $0x600] sm:$0xff]
  %v256 = vld [vmem:[%s1 + $0x608] sm:$0xff]
  %v257 = vld [vmem:[%s1 + $0x610] sm:$0xff]
  %v258 = vld [vmem:[%s1 + $0x618] sm:$0xff]
  %v259 = vld [vmem:[%s1 + $0x620] sm:$0xff]
  %v260 = vld [vmem:[%s1 + $0x628] sm:$0xff]
  %v261 = vld [vmem:[%s1 + $0x630] sm:$0xff]
  %v262 = vld [vmem:[%s1 + $0x638] sm:$0xff]
  %v263 = vld [vmem:[%s1 + $0x640] sm:$0xff]
  %v264 = vld [vmem:[%s1 + $0x648] sm:$0xff]
  %v265 = vld [vmem:[%s1 + $0x650] sm:$0xff]
  %v266 = vld [vmem:[%s1 + $0x658] sm:$0xff]
  %v267 = vld [vmem:[%s1 + $0x660] sm:$0xff]
  %v268 = vld [vmem:[%s1 + $0x668] sm:$0xff]
  %v269 = vld [vmem:[%s1 + $0x670] sm:$0xff]
  %v270 = vld [vmem:[%s1 + $0x678] sm:$0xff]
  %v271 = vld [vmem:[%s1 + $0x680] sm:$0xff]
  %v272 = vld [vmem:[%s1 + $0x688] sm:$0xff]
  %v273 = vld [vmem:[%s1 + $0x690] sm:$0xff]
  %v274 = vld [vmem:[%s1 + $0x698] sm:$0xff]
  %v275 = vld [vmem:[%s1 + $0x6a0] sm:$0xff]
  %v276 = vld [vmem:[%s1 + $0x6a8] sm:$0xff]
  %v277 = vld [vmem:[%s1 + $0x6b0] sm:$0xff]
  %v278 = vld [vmem:[%s1 + $0x6b8] sm:$0xff]
  %v279 = vld [vmem:[%s1 + $0x6c0] sm:$0xff]
  %v280 = vld [vmem:[%s1 + $0x6c8] sm:$0xff]
  %v281 = vld [vmem:[%s1 + $0x6d0] sm:$0xff]
  %v282 = vld [vmem:[%s1 + $0x6d8] sm:$0xff]
  %v283 = vld [vmem:[%s1 + $0x6e0] sm:$0xff]
  %v284 = vld [vmem:[%s1 + $0x6e8] sm:$0xff]
  %v285 = vld [vmem:[%s1 + $0x6f0] sm:$0xff]
  %v286 = vld [vmem:[%s1 + $0x6f8] sm:$0xff]
  %v287 = vld [vmem:[%s1 + $0x700] sm:$0xff]
  %v288 = vld [vmem:[%s1 + $0x708] sm:$0xff]
  %v289 = vld [vmem:[%s1 + $0x710] sm:$0xff]
  %v290 = vld [vmem:[%s1 + $0x718] sm:$0xff]
  %v291 = vld [vmem:[%s1 + $0x720] sm:$0xff]
  %v292 = vld [vmem:[%s1 + $0x728] sm:$0xff]
  %v293 = vld [vmem:[%s1 + $0x730] sm:$0xff]
  %v294 = vld [vmem:[%s1 + $0x738] sm:$0xff]
  %v295 = vld [vmem:[%s1 + $0x740] sm:$0xff]
  %v296 = vld [vmem:[%s1 + $0x748] sm:$0xff]
  %v297 = vld [vmem:[%s1 + $0x750] sm:$0xff]
  %v298 = vld [vmem:[%s1 + $0x758] sm:$0xff]
  %v299 = vld [vmem:[%s1 + $0x760] sm:$0xff]
  %v300 = vld [vmem:[%s1 + $0x768] sm:$0xff]
  %v301 = vld [vmem:[%s1 + $0x770] sm:$0xff]
  %v302 = vld [vmem:[%s1 + $0x778] sm:$0xff]
  %v303 = vld [vmem:[%s1 + $0x780] sm:$0xff]
  %v304 = vld [vmem:[%s1 + $0x788] sm:$0xff]
  %v305 = vld [vmem:[%s1 + $0x790] sm:$0xff]
  %v306 = vld [vmem:[%s1 + $0x798] sm:$0xff]
  %v307 = vld [vmem:[%s1 + $0x7a0] sm:$0xff]
  %v308 = vld [vmem:[%s1 + $0x7a8] sm:$0xff]
  %v309 = vld [vmem:[%s1 + $0x7b0] sm:$0xff]
  %v310 = vld [vmem:[%s1 + $0x7b8] sm:$0xff]
  %v311 = vld [vmem:[%s1 + $0x7c0] sm:$0xff]
  %v312 = vld [vmem:[%s1 + $0x7c8] sm:$0xff]
  %v313 = vld [vmem:[%s1 + $0x7d0] sm:$0xff]
  %v314 = vld [vmem:[%s1 + $0x7d8] sm:$0xff]
  %v315 = vld [vmem:[%s1 + $0x7e0] sm:$0xff]
  %v316 = vld [vmem:[%s1 + $0x7e8] sm:$0xff]
  %v317 = vld [vmem:[%s1 + $0x7f0] sm:$0xff]
  %v318 = vld [vmem:[%s1 + $0x7f8] sm:$0xff]
  %319 = vmatpush.msra.mxu0 %v78
  %320 = vmatpush.msra.mxu0 %v77
  %321 = vmatpush.msra.mxu0 %v76
  %322 = vmatpush.msra.mxu0 %v75
  %323 = vmatpush.msra.mxu0 %v74
  %324 = vmatpush.msra.mxu0 %v73
  %325 = vmatpush.msra.mxu0 %v72
  %326 = vmatpush.msra.mxu0 %v71
  %327 = vmatpush.msra.mxu0 %v70
  %328 = vmatpush.msra.mxu0 %v69
  %329 = vmatpush.msra.mxu0 %v68
  %330 = vmatpush.msra.mxu0 %v67
  %331 = vmatpush.msra.mxu0 %v66
  %332 = vmatpush.msra.mxu0 %v65
  %333 = vmatpush.msra.mxu0 %v64
  %334 = vmatpush.msra.mxu0 %v63
  %335 = vmatmul.f32.gmra.mxu0 %v47
  %v336 = vpop.f32.mrf.mxu0
  %v337 = vadd.f32 0.0, %v336
  %338 = vdwg.mxu0
  %339 = vmatpush.msra.mxu0 %v94
  %340 = vmatpush.msra.mxu0 %v93
  %341 = vmatpush.msra.mxu0 %v92
  %342 = vmatpush.msra.mxu0 %v91
  %343 = vmatpush.msra.mxu0 %v90
  %344 = vmatpush.msra.mxu0 %v89
  %345 = vmatpush.msra.mxu0 %v88
  %346 = vmatpush.msra.mxu0 %v87
  %347 = vmatpush.msra.mxu0 %v86
  %348 = vmatpush.msra.mxu0 %v85
  %349 = vmatpush.msra.mxu0 %v84
  %350 = vmatpush.msra.mxu0 %v83
  %351 = vmatpush.msra.mxu0 %v82
  %352 = vmatpush.msra.mxu0 %v81
  %353 = vmatpush.msra.mxu0 %v80
  %354 = vmatpush.msra.mxu0 %v79
  %355 = vmatmul.f32.gmra.mxu0 %v48
  %v356 = vpop.f32.mrf.mxu0
  %v357 = vadd.f32 0.0, %v356
  %358 = vdwg.mxu0
  %359 = vmatpush.msra.mxu0 %v110
  %360 = vmatpush.msra.mxu0 %v109
  %361 = vmatpush.msra.mxu0 %v108
  %362 = vmatpush.msra.mxu0 %v107
  %363 = vmatpush.msra.mxu0 %v106
  %364 = vmatpush.msra.mxu0 %v105
  %365 = vmatpush.msra.mxu0 %v104
  %366 = vmatpush.msra.mxu0 %v103
  %367 = vmatpush.msra.mxu0 %v102
  %368 = vmatpush.msra.mxu0 %v101
  %369 = vmatpush.msra.mxu0 %v100
  %370 = vmatpush.msra.mxu0 %v99
  %371 = vmatpush.msra.mxu0 %v98
  %372 = vmatpush.msra.mxu0 %v97
  %373 = vmatpush.msra.mxu0 %v96
  %374 = vmatpush.msra.mxu0 %v95
  %375 = vmatmul.f32.gmra.mxu0 %v49
  %v376 = vpop.f32.mrf.mxu0
  %v377 = vadd.f32 0.0, %v376
  %378 = vdwg.mxu0
  %379 = vmatpush.msra.mxu0 %v126
  %380 = vmatpush.msra.mxu0 %v125
  %381 = vmatpush.msra.mxu0 %v124
  %382 = vmatpush.msra.mxu0 %v123
  %383 = vmatpush.msra.mxu0 %v122
  %384 = vmatpush.msra.mxu0 %v121
  %385 = vmatpush.msra.mxu0 %v120
  %386 = vmatpush.msra.mxu0 %v119
  %387 = vmatpush.msra.mxu0 %v118
  %388 = vmatpush.msra.mxu0 %v117
  %389 = vmatpush.msra.mxu0 %v116
  %390 = vmatpush.msra.mxu0 %v115
  %391 = vmatpush.msra.mxu0 %v114
  %392 = vmatpush.msra.mxu0 %v113
  %393 = vmatpush.msra.mxu0 %v112
  %394 = vmatpush.msra.mxu0 %v111
  %395 = vmatmul.f32.gmra.mxu0 %v50
  %v396 = vpop.f32.mrf.mxu0
  %v397 = vadd.f32 0.0, %v396
  %398 = vdwg.mxu0
  %399 = vmatpush.msra.mxu0 %v142
  %400 = vmatpush.msra.mxu0 %v141
  %401 = vmatpush.msra.mxu0 %v140
  %402 = vmatpush.msra.mxu0 %v139
  %403 = vmatpush.msra.mxu0 %v138
  %404 = vmatpush.msra.mxu0 %v137
  %405 = vmatpush.msra.mxu0 %v136
  %406 = vmatpush.msra.mxu0 %v135
  %407 = vmatpush.msra.mxu0 %v134
  %408 = vmatpush.msra.mxu0 %v133
  %409 = vmatpush.msra.mxu0 %v132
  %410 = vmatpush.msra.mxu0 %v131
  %411 = vmatpush.msra.mxu0 %v130
  %412 = vmatpush.msra.mxu0 %v129
  %413 = vmatpush.msra.mxu0 %v128
  %414 = vmatpush.msra.mxu0 %v127
  %415 = vmatmul.f32.gmra.mxu0 %v51
  %v416 = vpop.f32.mrf.mxu0
  %v417 = vadd.f32 0.0, %v416
  %418 = vdwg.mxu0
  %419 = vmatpush.msra.mxu0 %v158
  %420 = vmatpush.msra.mxu0 %v157
  %421 = vmatpush.msra.mxu0 %v156
  %422 = vmatpush.msra.mxu0 %v155
  %423 = vmatpush.msra.mxu0 %v154
  %424 = vmatpush.msra.mxu0 %v153
  %425 = vmatpush.msra.mxu0 %v152
  %426 = vmatpush.msra.mxu0 %v151
  %427 = vmatpush.msra.mxu0 %v150
  %428 = vmatpush.msra.mxu0 %v149
  %429 = vmatpush.msra.mxu0 %v148
  %430 = vmatpush.msra.mxu0 %v147
  %431 = vmatpush.msra.mxu0 %v146
  %432 = vmatpush.msra.mxu0 %v145
  %433 = vmatpush.msra.mxu0 %v144
  %434 = vmatpush.msra.mxu0 %v143
  %435 = vmatmul.f32.gmra.mxu0 %v52
  %v436 = vpop.f32.mrf.mxu0
  %v437 = vadd.f32 0.0, %v436
  %438 = vdwg.mxu0
  %439 = vmatpush.msra.mxu0 %v174
  %440 = vmatpush.msra.mxu0 %v173
  %441 = vmatpush.msra.mxu0 %v172
  %442 = vmatpush.msra.mxu0 %v171
  %443 = vmatpush.msra.mxu0 %v170
  %444 = vmatpush.msra.mxu0 %v169
  %445 = vmatpush.msra.mxu0 %v168
  %446 = vmatpush.msra.mxu0 %v167
  %447 = vmatpush.msra.mxu0 %v166
  %448 = vmatpush.msra.mxu0 %v165
  %449 = vmatpush.msra.mxu0 %v164
  %450 = vmatpush.msra.mxu0 %v163
  %451 = vmatpush.msra.mxu0 %v162
  %452 = vmatpush.msra.mxu0 %v161
  %453 = vmatpush.msra.mxu0 %v160
  %454 = vmatpush.msra.mxu0 %v159
  %455 = vmatmul.f32.gmra.mxu0 %v53
  %v456 = vpop.f32.mrf.mxu0
  %v457 = vadd.f32 0.0, %v456
  %458 = vdwg.mxu0
  %459 = vmatpush.msra.mxu0 %v190
  %460 = vmatpush.msra.mxu0 %v189
  %461 = vmatpush.msra.mxu0 %v188
  %462 = vmatpush.msra.mxu0 %v187
  %463 = vmatpush.msra.mxu0 %v186
  %464 = vmatpush.msra.mxu0 %v185
  %465 = vmatpush.msra.mxu0 %v184
  %466 = vmatpush.msra.mxu0 %v183
  %467 = vmatpush.msra.mxu0 %v182
  %468 = vmatpush.msra.mxu0 %v181
  %469 = vmatpush.msra.mxu0 %v180
  %470 = vmatpush.msra.mxu0 %v179
  %471 = vmatpush.msra.mxu0 %v178
  %472 = vmatpush.msra.mxu0 %v177
  %473 = vmatpush.msra.mxu0 %v176
  %474 = vmatpush.msra.mxu0 %v175
  %475 = vmatmul.f32.gmra.mxu0 %v54
  %v476 = vpop.f32.mrf.mxu0
  %v477 = vadd.f32 0.0, %v476
  %478 = vdwg.mxu0
  %479 = vmatpush.msra.mxu0 %v206
  %480 = vmatpush.msra.mxu0 %v205
  %481 = vmatpush.msra.mxu0 %v204
  %482 = vmatpush.msra.mxu0 %v203
  %483 = vmatpush.msra.mxu0 %v202
  %484 = vmatpush.msra.mxu0 %v201
  %485 = vmatpush.msra.mxu0 %v200
  %486 = vmatpush.msra.mxu0 %v199
  %487 = vmatpush.msra.mxu0 %v198
  %488 = vmatpush.msra.mxu0 %v197
  %489 = vmatpush.msra.mxu0 %v196
  %490 = vmatpush.msra.mxu0 %v195
  %491 = vmatpush.msra.mxu0 %v194
  %492 = vmatpush.msra.mxu0 %v193
  %493 = vmatpush.msra.mxu0 %v192
  %494 = vmatpush.msra.mxu0 %v191
  %495 = vmatmul.f32.gmra.mxu0 %v55
  %v496 = vpop.f32.mrf.mxu0
  %v497 = vadd.f32 0.0, %v496
  %498 = vdwg.mxu0
  %499 = vmatpush.msra.mxu0 %v222
  %500 = vmatpush.msra.mxu0 %v221
  %501 = vmatpush.msra.mxu0 %v220
  %502 = vmatpush.msra.mxu0 %v219
  %503 = vmatpush.msra.mxu0 %v218
  %504 = vmatpush.msra.mxu0 %v217
  %505 = vmatpush.msra.mxu0 %v216
  %506 = vmatpush.msra.mxu0 %v215
  %507 = vmatpush.msra.mxu0 %v214
  %508 = vmatpush.msra.mxu0 %v213
  %509 = vmatpush.msra.mxu0 %v212
  %510 = vmatpush.msra.mxu0 %v211
  %511 = vmatpush.msra.mxu0 %v210
  %512 = vmatpush.msra.mxu0 %v209
  %513 = vmatpush.msra.mxu0 %v208
  %514 = vmatpush.msra.mxu0 %v207
  %515 = vmatmul.f32.gmra.mxu0 %v56
  %v516 = vpop.f32.mrf.mxu0
  %v517 = vadd.f32 0.0, %v516
  %518 = vdwg.mxu0
  %519 = vmatpush.msra.mxu0 %v238
  %520 = vmatpush.msra.mxu0 %v237
  %521 = vmatpush.msra.mxu0 %v236
  %522 = vmatpush.msra.mxu0 %v235
  %523 = vmatpush.msra.mxu0 %v234
  %524 = vmatpush.msra.mxu0 %v233
  %525 = vmatpush.msra.mxu0 %v232
  %526 = vmatpush.msra.mxu0 %v231
  %527 = vmatpush.msra.mxu0 %v230
  %528 = vmatpush.msra.mxu0 %v229
  %529 = vmatpush.msra.mxu0 %v228
  %530 = vmatpush.msra.mxu0 %v227
  %531 = vmatpush.msra.mxu0 %v226
  %532 = vmatpush.msra.mxu0 %v225
  %533 = vmatpush.msra.mxu0 %v224
  %534 = vmatpush.msra.mxu0 %v223
  %535 = vmatmul.f32.gmra.mxu0 %v57
  %v536 = vpop.f32.mrf.mxu0
  %v537 = vadd.f32 0.0, %v536
  %538 = vdwg.mxu0
  %539 = vmatpush.msra.mxu0 %v254
  %540 = vmatpush.msra.mxu0 %v253
  %541 = vmatpush.msra.mxu0 %v252
  %542 = vmatpush.msra.mxu0 %v251
  %543 = vmatpush.msra.mxu0 %v250
  %544 = vmatpush.msra.mxu0 %v249
  %545 = vmatpush.msra.mxu0 %v248
  %546 = vmatpush.msra.mxu0 %v247
  %547 = vmatpush.msra.mxu0 %v246
  %548 = vmatpush.msra.mxu0 %v245
  %549 = vmatpush.msra.mxu0 %v244
  %550 = vmatpush.msra.mxu0 %v243
  %551 = vmatpush.msra.mxu0 %v242
  %552 = vmatpush.msra.mxu0 %v241
  %553 = vmatpush.msra.mxu0 %v240
  %554 = vmatpush.msra.mxu0 %v239
  %555 = vmatmul.f32.gmra.mxu0 %v58
  %v556 = vpop.f32.mrf.mxu0
  %v557 = vadd.f32 0.0, %v556
  %558 = vdwg.mxu0
  %559 = vmatpush.msra.mxu0 %v270
  %560 = vmatpush.msra.mxu0 %v269
  %561 = vmatpush.msra.mxu0 %v268
  %562 = vmatpush.msra.mxu0 %v267
  %563 = vmatpush.msra.mxu0 %v266
  %564 = vmatpush.msra.mxu0 %v265
  %565 = vmatpush.msra.mxu0 %v264
  %566 = vmatpush.msra.mxu0 %v263
  %567 = vmatpush.msra.mxu0 %v262
  %568 = vmatpush.msra.mxu0 %v261
  %569 = vmatpush.msra.mxu0 %v260
  %570 = vmatpush.msra.mxu0 %v259
  %571 = vmatpush.msra.mxu0 %v258
  %572 = vmatpush.msra.mxu0 %v257
  %573 = vmatpush.msra.mxu0 %v256
  %574 = vmatpush.msra.mxu0 %v255
  %575 = vmatmul.f32.gmra.mxu0 %v59
  %v576 = vpop.f32.mrf.mxu0
  %v577 = vadd.f32 0.0, %v576
  %578 = vdwg.mxu0
  %579 = vmatpush.msra.mxu0 %v286
  %580 = vmatpush.msra.mxu0 %v285
  %581 = vmatpush.msra.mxu0 %v284
  %582 = vmatpush.msra.mxu0 %v283
  %583 = vmatpush.msra.mxu0 %v282
  %584 = vmatpush.msra.mxu0 %v281
  %585 = vmatpush.msra.mxu0 %v280
  %586 = vmatpush.msra.mxu0 %v279
  %587 = vmatpush.msra.mxu0 %v278
  %588 = vmatpush.msra.mxu0 %v277
  %589 = vmatpush.msra.mxu0 %v276
  %590 = vmatpush.msra.mxu0 %v275
  %591 = vmatpush.msra.mxu0 %v274
  %592 = vmatpush.msra.mxu0 %v273
  %593 = vmatpush.msra.mxu0 %v272
  %594 = vmatpush.msra.mxu0 %v271
  %595 = vmatmul.f32.gmra.mxu0 %v60
  %v596 = vpop.f32.mrf.mxu0
  %v597 = vadd.f32 0.0, %v596
  %598 = vdwg.mxu0
  %599 = vmatpush.msra.mxu0 %v302
  %600 = vmatpush.msra.mxu0 %v301
  %601 = vmatpush.msra.mxu0 %v300
  %602 = vmatpush.msra.mxu0 %v299
  %603 = vmatpush.msra.mxu0 %v298
  %604 = vmatpush.msra.mxu0 %v297
  %605 = vmatpush.msra.mxu0 %v296
  %606 = vmatpush.msra.mxu0 %v295
  %607 = vmatpush.msra.mxu0 %v294
  %608 = vmatpush.msra.mxu0 %v293
  %609 = vmatpush.msra.mxu0 %v292
  %610 = vmatpush.msra.mxu0 %v291
  %611 = vmatpush.msra.mxu0 %v290
  %612 = vmatpush.msra.mxu0 %v289
  %613 = vmatpush.msra.mxu0 %v288
  %614 = vmatpush.msra.mxu0 %v287
  %615 = vmatmul.f32.gmra.mxu0 %v61
  %v616 = vpop.f32.mrf.mxu0
  %v617 = vadd.f32 0.0, %v616
  %618 = vdwg.mxu0
  %619 = vmatpush.msra.mxu0 %v318
  %620 = vmatpush.msra.mxu0 %v317
  %621 = vmatpush.msra.mxu0 %v316
  %622 = vmatpush.msra.mxu0 %v315
  %623 = vmatpush.msra.mxu0 %v314
  %624 = vmatpush.msra.mxu0 %v313
  %625 = vmatpush.msra.mxu0 %v312
  %626 = vmatpush.msra.mxu0 %v311
  %627 = vmatpush.msra.mxu0 %v310
  %628 = vmatpush.msra.mxu0 %v309
  %629 = vmatpush.msra.mxu0 %v308
  %630 = vmatpush.msra.mxu0 %v307
  %631 = vmatpush.msra.mxu0 %v306
  %632 = vmatpush.msra.mxu0 %v305
  %633 = vmatpush.msra.mxu0 %v304
  %634 = vmatpush.msra.mxu0 %v303
  %635 = vmatmul.f32.gmra.mxu0 %v62
  %v636 = vpop.f32.mrf.mxu0
  %v637 = vadd.f32 0.0, %v636
  %638 = vdwg.mxu0
  %v639 = vadd.f32 %v31, %v337
  %v640 = vadd.f32 %v32, %v357
  %v641 = vadd.f32 %v33, %v377
  %v642 = vadd.f32 %v34, %v397
  %v643 = vadd.f32 %v35, %v417
  %v644 = vadd.f32 %v36, %v437
  %v645 = vadd.f32 %v37, %v457
  %v646 = vadd.f32 %v38, %v477
  %v647 = vadd.f32 %v39, %v497
  %v648 = vadd.f32 %v40, %v517
  %v649 = vadd.f32 %v41, %v537
  %v650 = vadd.f32 %v42, %v557
  %v651 = vadd.f32 %v43, %v577
  %v652 = vadd.f32 %v44, %v597
  %v653 = vadd.f32 %v45, %v617
  %v654 = vadd.f32 %v46, %v637
  %655 = vst [vmem:[%s2] sm:$0xff] %v639
  %656 = vst [vmem:[%s2 + $0x8] sm:$0xff] %v640
  %657 = vst [vmem:[%s2 + $0x10] sm:$0xff] %v641
  %658 = vst [vmem:[%s2 + $0x18] sm:$0xff] %v642
  %659 = vst [vmem:[%s2 + $0x20] sm:$0xff] %v643
  %660 = vst [vmem:[%s2 + $0x28] sm:$0xff] %v644
  %661 = vst [vmem:[%s2 + $0x30] sm:$0xff] %v645
  %662 = vst [vmem:[%s2 + $0x38] sm:$0xff] %v646
  %663 = vst [vmem:[%s2 + $0x40] sm:$0xff] %v647
  %664 = vst [vmem:[%s2 + $0x48] sm:$0xff] %v648
  %665 = vst [vmem:[%s2 + $0x50] sm:$0xff] %v649
  %666 = vst [vmem:[%s2 + $0x58] sm:$0xff] %v650
  %667 = vst [vmem:[%s2 + $0x60] sm:$0xff] %v651
  %668 = vst [vmem:[%s2 + $0x68] sm:$0xff] %v652
  %669 = vst [vmem:[%s2 + $0x70] sm:$0xff] %v653
  %670 = vst [vmem:[%s2 + $0x78] sm:$0xff] %v654
  // Predicated region
  $region14: #{winograd_forward.1} parent=0 // pred_check
    _
  $region15: #{winograd_forward.1} parent=0 // pred_check_branch
    %672 = sbr.rel (0) target = $region17
  $region16: #{winograd_forward.1} parent=0 // pred_region
    _
  $region17: #{winograd_forward.1} parent=0 // pred_fallthru
    _
  // Predicated region
  $region18: #{winograd_forward.1} parent=0 // pred_check
    _
  $region19: #{winograd_forward.1} parent=0 // pred_check_branch
    %674 = sbr.rel (0) target = $region21
  $region20: #{winograd_forward.1} parent=0 // pred_region
    _
  $region21: #{winograd_forward.1} parent=0 // pred_fallthru
    _

</llo_original>
